<compile_context>
chip_gen: v6e
topology: v6e:2x2x1
jax: 0.10.0
libtpu: 0.0.40
codegen_flags: <defaults>
</compile_context>

<pallas_src>
import functools

import jax
import jax.numpy as jnp
from jax.experimental import pallas as pl
from jax.experimental.pallas import tpu as pltpu

_BN_EPS = 1e-5


# ---------------------------------------------------------------------------
# Phase 1: projection GEMMs + BN statistics accumulation
# ---------------------------------------------------------------------------
def _proj_stats_kernel(x_ref, w1_ref, b1_ref, w2_ref, b2_ref,
                       z_ref, sum_ref, sq_ref):
    i = pl.program_id(0)

    # Linear 1 + ReLU : bf16 operands on the MXU, f32 accumulation.
    h = jnp.dot(x_ref[...], w1_ref[...], preferred_element_type=jnp.float32)
    h = jnp.maximum(h + b1_ref[...], 0.0)

    # Linear 2 : cast activations back to bf16 for the MXU, accumulate f32.
    z = jnp.dot(h.astype(w2_ref.dtype), w2_ref[...],
                preferred_element_type=jnp.float32) + b2_ref[...]

    # Un-normalized projection for this batch tile.
    z_ref[...] = z

    # Full-batch BN statistics, accumulated across the (arbitrary) batch axis.
    @pl.when(i == 0)
    def _():
        sum_ref[...] = jnp.zeros_like(sum_ref)
        sq_ref[...] = jnp.zeros_like(sq_ref)

    sum_ref[...] += jnp.sum(z, axis=0, keepdims=True)
    sq_ref[...] += jnp.sum(z * z, axis=0, keepdims=True)


# ---------------------------------------------------------------------------
# Phase 2: cheap BatchNorm finalize (folded scale/shift epilogue)
# ---------------------------------------------------------------------------
def _bn_finalize_kernel(z_ref, sum_ref, sq_ref, gamma_ref, beta_ref, o_ref,
                        *, inv_b):
    mean = sum_ref[...] * inv_b                       # (1, proj)
    var = sq_ref[...] * inv_b - mean * mean           # biased variance
    scale = gamma_ref[...] * jax.lax.rsqrt(var + _BN_EPS)
    shift = beta_ref[...] - mean * scale
    o_ref[...] = z_ref[...] * scale + shift           # one FMA per element


def _pick_batch_tile(batch, want):
    """Largest tile <= `want` that divides the batch (falls back to full batch)."""
    tb = min(want, batch)
    while tb > 8 and batch % tb != 0:
        tb //= 2
    if batch % tb != 0:
        tb = batch  # ragged small batch: single full-array block
    return tb


def contrastive_net_forward(x, w1, b1, w2, b2, gamma, beta, *, block_b=256):
    B, in_dim = x.shape
    hidden = w1.shape[1]
    proj = w2.shape[1]

    tb = _pick_batch_tile(B, block_b)
    grid = (B // tb,)

    # bf16 MXU operands (accumulation and BN statistics stay f32).
    xb = x.astype(jnp.bfloat16)
    w1b = w1.astype(jnp.bfloat16)
    w2b = w2.astype(jnp.bfloat16)
    b1r = b1.reshape(1, hidden).astype(jnp.float32)
    b2r = b2.reshape(1, proj).astype(jnp.float32)
    gr = gamma.reshape(1, proj).astype(jnp.float32)
    br = beta.reshape(1, proj).astype(jnp.float32)

    # ---- Phase 1: tiled projection + full-batch sum / sumsq ---------------
    z, zsum, zsq = pl.pallas_call(
        _proj_stats_kernel,
        out_shape=(
            jax.ShapeDtypeStruct((B, proj), jnp.float32),
            jax.ShapeDtypeStruct((1, proj), jnp.float32),
            jax.ShapeDtypeStruct((1, proj), jnp.float32),
        ),
        grid=grid,
        in_specs=[
            pl.BlockSpec((tb, in_dim), lambda i: (i, 0)),      # x tile
            pl.BlockSpec((in_dim, hidden), lambda i: (0, 0)),  # W1 (resident)
            pl.BlockSpec((1, hidden), lambda i: (0, 0)),       # b1
            pl.BlockSpec((hidden, proj), lambda i: (0, 0)),    # W2 (resident)
            pl.BlockSpec((1, proj), lambda i: (0, 0)),         # b2
        ],
        out_specs=(
            pl.BlockSpec((tb, proj), lambda i: (i, 0)),        # z tile
            pl.BlockSpec((1, proj), lambda i: (0, 0)),         # sum accumulator
            pl.BlockSpec((1, proj), lambda i: (0, 0)),         # sumsq accumulator
        ),
        compiler_params=pltpu.CompilerParams(
            # Batch axis carries the BN-stat accumulators -> "arbitrary".
            # (Per-core partial stats + cross-core reduce would unlock v7x
            #  megacore here; omitted for simplicity.)
            dimension_semantics=("arbitrary",),
            vmem_limit_bytes=32 * 1024 * 1024,
        ),
        cost_estimate=pl.CostEstimate(
            flops=2 * B * (in_dim * hidden + hidden * proj),
            transcendentals=0,
            bytes_accessed=(xb.size * 2 + w1b.size * 2 + w2b.size * 2
                            + (B * proj + 2 * proj) * 4),
        ),
    )(xb, w1b, b1r, w2b, b2r)

    # ---- Phase 2: normalize pass (touches only B*proj*4 bytes twice) ------
    inv_b = 1.0 / float(B)
    out = pl.pallas_call(
        functools.partial(_bn_finalize_kernel, inv_b=inv_b),
        out_shape=jax.ShapeDtypeStruct((B, proj), jnp.float32),
        grid=grid,
        in_specs=[
            pl.BlockSpec((tb, proj), lambda i: (i, 0)),        # z tile
            pl.BlockSpec((1, proj), lambda i: (0, 0)),         # sum
            pl.BlockSpec((1, proj), lambda i: (0, 0)),         # sumsq
            pl.BlockSpec((1, proj), lambda i: (0, 0)),         # gamma
            pl.BlockSpec((1, proj), lambda i: (0, 0)),         # beta
        ],
        out_specs=pl.BlockSpec((tb, proj), lambda i: (i, 0)),
        compiler_params=pltpu.CompilerParams(
            dimension_semantics=("parallel",),
            vmem_limit_bytes=32 * 1024 * 1024,
        ),
        cost_estimate=pl.CostEstimate(
            flops=3 * B * proj,
            transcendentals=proj,
            bytes_accessed=2 * B * proj * 4,
        ),
    )(z, zsum, zsq, gr, br)
    return out


def init_params(key, input_dim, projection_dim=128, hidden=256):
    # Mimics PyTorch Linear init U(-1/sqrt(fan_in), 1/sqrt(fan_in)); BN affine = (1, 0).
    k1, k2, k3, k4 = jax.random.split(key, 4)
    lim1 = 1.0 / jnp.sqrt(input_dim)
    lim2 = 1.0 / jnp.sqrt(hidden)
    w1 = jax.random.uniform(k1, (input_dim, hidden), jnp.float32, -lim1, lim1)
    b1 = jax.random.uniform(k2, (hidden,), jnp.float32, -lim1, lim1)
    w2 = jax.random.uniform(k3, (hidden, projection_dim), jnp.float32, -lim2, lim2)
    b2 = jax.random.uniform(k4, (projection_dim,), jnp.float32, -lim2, lim2)
    gamma = jnp.ones((projection_dim,), jnp.float32)
    beta = jnp.zeros((projection_dim,), jnp.float32)
    return w1, b1, w2, b2, gamma, beta


if __name__ == "__main__":
    key = jax.random.PRNGKey(0)
    batch, input_dim, projection_dim = 16, 32, 128

    kx, kp = jax.random.split(key)
    x = jax.random.normal(kx, (batch, input_dim), jnp.float32)
    params = init_params(kp, input_dim, projection_dim)

    # block_b=8 -> 2 grid steps at this toy size, exercising the pipelined
    # batch tiling and the resident BN-stat accumulators.
    out = contrastive_net_forward(x, *params, block_b=8)
    jax.block_until_ready(out)

    # Pure-JAX reference with identical numerics (bf16 matmul operands,
    # f32 accumulation, training-mode BatchNorm with biased variance).
    w1, b1, w2, b2, gamma, beta = params
    xb = x.astype(jnp.bfloat16)
    h = jnp.maximum(
        jnp.dot(xb, w1.astype(jnp.bfloat16), preferred_element_type=jnp.float32) + b1, 0.0)
    z = jnp.dot(h.astype(jnp.bfloat16), w2.astype(jnp.bfloat16),
                preferred_element_type=jnp.float32) + b2
    mean = jnp.mean(z, axis=0, keepdims=True)
    var = jnp.mean(z * z, axis=0, keepdims=True) - mean * mean
    ref = (z - mean) * jax.lax.rsqrt(var + _BN_EPS) * gamma + beta

    assert out.shape == (batch, projection_dim)
    assert jnp.allclose(out, ref, atol=2e-3, rtol=2e-3), float(jnp.max(jnp.abs(out - ref)))

    print("KERNEL_OK")
</pallas_src>

<mosaic_0001>
module attributes {stable_mosaic.version = 11 : i64} {
  func.func @_proj_stats_kernel(%arg0: i32, %arg1: memref<8x32xbf16, #tpu.memory_space<vmem>>, %arg2: memref<32x256xbf16, #tpu.memory_space<vmem>>, %arg3: memref<1x256xf32, #tpu.memory_space<vmem>>, %arg4: memref<256x128xbf16, #tpu.memory_space<vmem>>, %arg5: memref<1x128xf32, #tpu.memory_space<vmem>>, %arg6: memref<8x128xf32, #tpu.memory_space<vmem>>, %arg7: memref<1x128xf32, #tpu.memory_space<vmem>>, %arg8: memref<1x128xf32, #tpu.memory_space<vmem>>) attributes {dimension_semantics = [#tpu.dimension_semantics<arbitrary>], iteration_bounds = array<i64: 2>, scalar_prefetch = 0 : i64, scratch_operands = 0 : i64, tpu.core_type = #tpu.core_type<tc>, window_params = [{transform_indices = @transform_0, window_bounds = array<i64: 8, 32>}, {pipeline_mode = #tpu.pipeline_mode<synchronous>, transform_indices = @transform_1, window_bounds = array<i64: 32, 256>}, {pipeline_mode = #tpu.pipeline_mode<synchronous>, transform_indices = @transform_2, window_bounds = array<i64: 1, 256>}, {pipeline_mode = #tpu.pipeline_mode<synchronous>, transform_indices = @transform_3, window_bounds = array<i64: 256, 128>}, {pipeline_mode = #tpu.pipeline_mode<synchronous>, transform_indices = @transform_4, window_bounds = array<i64: 1, 128>}, {transform_indices = @transform_5, window_bounds = array<i64: 8, 128>}, {pipeline_mode = #tpu.pipeline_mode<synchronous>, transform_indices = @transform_6, window_bounds = array<i64: 1, 128>}, {pipeline_mode = #tpu.pipeline_mode<synchronous>, transform_indices = @transform_7, window_bounds = array<i64: 1, 128>}]} {
    %c0 = arith.constant 0 : index
    %c0_0 = arith.constant 0 : index
    %0 = vector.load %arg1[%c0, %c0_0] : memref<8x32xbf16, #tpu.memory_space<vmem>>, vector<8x32xbf16>
    %c0_1 = arith.constant 0 : index
    %c0_2 = arith.constant 0 : index
    %1 = vector.load %arg2[%c0_1, %c0_2] : memref<32x256xbf16, #tpu.memory_space<vmem>>, vector<32x256xbf16>
    %cst = arith.constant dense<0.000000e+00> : vector<8x256xf32>
    %2 = tpu.matmul %0, %1, %cst {dimension_numbers = #tpu.dot_dimension_numbers<[1], [0], [0], [1], [0, 0, 1, 1], [], []>} : vector<8x32xbf16>, vector<32x256xbf16>, vector<8x256xf32> -> vector<8x256xf32>
    %c0_3 = arith.constant 0 : index
    %c0_4 = arith.constant 0 : index
    %3 = vector.load %arg3[%c0_3, %c0_4] : memref<1x256xf32, #tpu.memory_space<vmem>>, vector<1x256xf32>
    %4 = vector.broadcast %3 : vector<1x256xf32> to vector<8x256xf32>
    %5 = arith.addf %2, %4 : vector<8x256xf32>
    %cst_5 = arith.constant 0.000000e+00 : f32
    %6 = vector.broadcast %cst_5 : f32 to vector<8x256xf32>
    %7 = arith.maximumf %5, %6 : vector<8x256xf32>
    %8 = arith.truncf %7 : vector<8x256xf32> to vector<8x256xbf16>
    %c0_6 = arith.constant 0 : index
    %c0_7 = arith.constant 0 : index
    %9 = vector.load %arg4[%c0_6, %c0_7] : memref<256x128xbf16, #tpu.memory_space<vmem>>, vector<256x128xbf16>
    %cst_8 = arith.constant dense<0.000000e+00> : vector<8x128xf32>
    %10 = tpu.matmul %8, %9, %cst_8 {dimension_numbers = #tpu.dot_dimension_numbers<[1], [0], [0], [1], [0, 0, 1, 1], [], []>} : vector<8x256xbf16>, vector<256x128xbf16>, vector<8x128xf32> -> vector<8x128xf32>
    %c0_9 = arith.constant 0 : index
    %c0_10 = arith.constant 0 : index
    %11 = vector.load %arg5[%c0_9, %c0_10] : memref<1x128xf32, #tpu.memory_space<vmem>>, vector<1x128xf32>
    %12 = vector.broadcast %11 : vector<1x128xf32> to vector<8x128xf32>
    %13 = arith.addf %10, %12 : vector<8x128xf32>
    %c0_11 = arith.constant 0 : index
    %c0_12 = arith.constant 0 : index
    %14 = vector.load %arg6[%c0_11, %c0_12] : memref<8x128xf32, #tpu.memory_space<vmem>>, vector<8x128xf32>
    tpu.vector_store %arg6[%c0_11, %c0_12], %13 {strides = array<i32>} : memref<8x128xf32, #tpu.memory_space<vmem>>, vector<8x128xf32>,
    %c0_i32 = arith.constant 0 : i32
    %15 = arith.cmpi eq, %arg0, %c0_i32 : i32
    %16 = arith.extui %15 : i1 to i32
    %c0_i32_13 = arith.constant 0 : i32
    %17 = arith.cmpi ne, %16, %c0_i32_13 : i32
    scf.if %17 {
      %cst_24 = arith.constant 0.000000e+00 : f32
      %29 = vector.broadcast %cst_24 : f32 to vector<1x128xf32>
      %c0_25 = arith.constant 0 : index
      %c0_26 = arith.constant 0 : index
      %30 = vector.load %arg7[%c0_25, %c0_26] : memref<1x128xf32, #tpu.memory_space<vmem>>, vector<1x128xf32>
      tpu.vector_store %arg7[%c0_25, %c0_26], %29 {strides = array<i32>} : memref<1x128xf32, #tpu.memory_space<vmem>>, vector<1x128xf32>,
      %cst_27 = arith.constant 0.000000e+00 : f32
      %31 = vector.broadcast %cst_27 : f32 to vector<1x128xf32>
      %c0_28 = arith.constant 0 : index
      %c0_29 = arith.constant 0 : index
      %32 = vector.load %arg8[%c0_28, %c0_29] : memref<1x128xf32, #tpu.memory_space<vmem>>, vector<1x128xf32>
      tpu.vector_store %arg8[%c0_28, %c0_29], %31 {strides = array<i32>} : memref<1x128xf32, #tpu.memory_space<vmem>>, vector<1x128xf32>,
    } else {
    }
    %c0_14 = arith.constant 0 : index
    %c0_15 = arith.constant 0 : index
    %18 = vector.load %arg7[%c0_14, %c0_15] : memref<1x128xf32, #tpu.memory_space<vmem>>, vector<1x128xf32>
    %cst_16 = arith.constant dense<0.000000e+00> : vector<128xf32>
    %19 = vector.multi_reduction <add>, %13, %cst_16 [0] : vector<8x128xf32> to vector<128xf32>
    %20 = vector.shape_cast %19 : vector<128xf32> to vector<1x128xf32>
    %21 = arith.addf %18, %20 : vector<1x128xf32>
    %c0_17 = arith.constant 0 : index
    %c0_18 = arith.constant 0 : index
    %22 = vector.load %arg7[%c0_17, %c0_18] : memref<1x128xf32, #tpu.memory_space<vmem>>, vector<1x128xf32>
    tpu.vector_store %arg7[%c0_17, %c0_18], %21 {strides = array<i32>} : memref<1x128xf32, #tpu.memory_space<vmem>>, vector<1x128xf32>,
    %c0_19 = arith.constant 0 : index
    %c0_20 = arith.constant 0 : index
    %23 = vector.load %arg8[%c0_19, %c0_20] : memref<1x128xf32, #tpu.memory_space<vmem>>, vector<1x128xf32>
    %24 = arith.mulf %13, %13 : vector<8x128xf32>
    %cst_21 = arith.constant dense<0.000000e+00> : vector<128xf32>
    %25 = vector.multi_reduction <add>, %24, %cst_21 [0] : vector<8x128xf32> to vector<128xf32>
    %26 = vector.shape_cast %25 : vector<128xf32> to vector<1x128xf32>
    %27 = arith.addf %23, %26 : vector<1x128xf32>
    %c0_22 = arith.constant 0 : index
    %c0_23 = arith.constant 0 : index
    %28 = vector.load %arg8[%c0_22, %c0_23] : memref<1x128xf32, #tpu.memory_space<vmem>>, vector<1x128xf32>
    tpu.vector_store %arg8[%c0_22, %c0_23], %27 {strides = array<i32>} : memref<1x128xf32, #tpu.memory_space<vmem>>, vector<1x128xf32>,
    return
  }
  func.func @transform_0(%arg0: i32) -> (i32, i32) {
    %c0_i32 = arith.constant 0 : i32
    %c0_i32_0 = arith.constant 0 : i32
    return %arg0, %c0_i32 : i32, i32
  }
  func.func @transform_1(%arg0: i32) -> (i32, i32) {
    %c0_i32 = arith.constant 0 : i32
    %c0_i32_0 = arith.constant 0 : i32
    %c0_i32_1 = arith.constant 0 : i32
    return %c0_i32, %c0_i32_0 : i32, i32
  }
  func.func @transform_2(%arg0: i32) -> (i32, i32) {
    %c0_i32 = arith.constant 0 : i32
    %c0_i32_0 = arith.constant 0 : i32
    %c0_i32_1 = arith.constant 0 : i32
    return %c0_i32, %c0_i32_0 : i32, i32
  }
  func.func @transform_3(%arg0: i32) -> (i32, i32) {
    %c0_i32 = arith.constant 0 : i32
    %c0_i32_0 = arith.constant 0 : i32
    %c0_i32_1 = arith.constant 0 : i32
    return %c0_i32, %c0_i32_0 : i32, i32
  }
  func.func @transform_4(%arg0: i32) -> (i32, i32) {
    %c0_i32 = arith.constant 0 : i32
    %c0_i32_0 = arith.constant 0 : i32
    %c0_i32_1 = arith.constant 0 : i32
    return %c0_i32, %c0_i32_0 : i32, i32
  }
  func.func @transform_5(%arg0: i32) -> (i32, i32) {
    %c0_i32 = arith.constant 0 : i32
    %c0_i32_0 = arith.constant 0 : i32
    return %arg0, %c0_i32 : i32, i32
  }
  func.func @transform_6(%arg0: i32) -> (i32, i32) {
    %c0_i32 = arith.constant 0 : i32
    %c0_i32_0 = arith.constant 0 : i32
    %c0_i32_1 = arith.constant 0 : i32
    return %c0_i32, %c0_i32_0 : i32, i32
  }
  func.func @transform_7(%arg0: i32) -> (i32, i32) {
    %c0_i32 = arith.constant 0 : i32
    %c0_i32_0 = arith.constant 0 : i32
    %c0_i32_1 = arith.constant 0 : i32
    return %c0_i32, %c0_i32_0 : i32, i32
  }
}

</mosaic_0001>

<llo_original>
// kernel: tpu_custom_call.1
$region0: #{tpu_custom_call.1}
  #allocation0 [shape = 'u32[]', space=smem, size = 0x4, offset = 0x4, fixed_abs, tag = 'smem constant byte address 0x4 - core index']
  #allocation1 [shape = 'u32[144,128]{1,0:T(1,128)}', space=vmem, size = 0x12000, scoped, tag = 'internal scratch']
  %s0 = inlined_call_operand.hbm [shape: bf16[16,32], index: 0, kind: input, shape index: {}]
  %s1 = inlined_call_operand.hbm [shape: bf16[32,256], index: 1, kind: input, shape index: {}]
  %s2 = inlined_call_operand.vmem [shape: f32[1,256], index: 2, kind: input, shape index: {}]
  %s3 = inlined_call_operand.hbm [shape: bf16[256,128], index: 3, kind: input, shape index: {}]
  %s4 = inlined_call_operand.vmem [shape: f32[1,128], index: 4, kind: input, shape index: {}]
  %s5 = inlined_call_operand.hbm [shape: f32[16,128], index: 5, kind: output, shape index: {0}]
  %s6 = inlined_call_operand.hbm [shape: f32[1,128], index: 6, kind: output, shape index: {1}]
  %s7 = inlined_call_operand.hbm [shape: f32[1,128], index: 7, kind: output, shape index: {2}]
  %8 = xla_tuple %s5, %s6, %s7
  %s9 = sld [smem:[#allocation0]]
  $region85: #{tpu_custom_call.1} parent=0
    _
  %s11 = ssub.s32 1, %s9
  %s12 = scalar_select 0, %s11, %s9
  $region1: #{tpu_custom_call.1} parent=0
    #allocation2 [shape = 'u8[4096]{0}', space=vmem, size = 0x1000, scoped, tag = 'input window, operand 0']
    #allocation3 [shape = 's32[2]{0}', space=sflag, size = 0x8, scoped, tag = 'scoped memory for tpu_custom_call.1']
    #allocation4 [shape = 's32[2]{0}', space=sflag, size = 0x8, scoped, tag = 'scoped memory for tpu_custom_call.1']
    #allocation5 [shape = 'u8[16384]{0}', space=vmem, size = 0x4000, scoped, tag = 'input window, operand 1, single buffered']
    #allocation6 [shape = 's32[1]{0}', space=sflag, size = 0x4, scoped, tag = 'scoped memory for tpu_custom_call.1']
    #allocation7 [shape = 'u8[65536]{0}', space=vmem, size = 0x10000, scoped, tag = 'input window, operand 3, single buffered']
    #allocation8 [shape = 'u8[8192]{0}', space=vmem, size = 0x2000, scoped, tag = 'output window, operand 0']
    #allocation9 [shape = 'u8[512]{0}', space=vmem, size = 0x400, scoped, tag = 'output window, operand 1, single buffered']
    #allocation10 [shape = 's32[1]{0}', space=sflag, size = 0x4, scoped, tag = 'scoped memory for tpu_custom_call.1']
    #allocation11 [shape = 'u8[512]{0}', space=vmem, size = 0x400, scoped, tag = 'output window, operand 2, single buffered']
    %13 = vsyncpa [#allocation3], 0
    %s14 = scalar_lea.sflag [#allocation3], 1
    %15 = vsyncpa %s14, 0
    %16 = vsyncpa [#allocation6], 0
    %17 = vsyncpa [#allocation4], 0
    %s18 = scalar_lea.sflag [#allocation4], 1
    %19 = vsyncpa %s18, 0
    %20 = vsyncpa [#allocation10], 0
    loop: start=0, step=1, limit=4
    $region2: #{tpu_custom_call.1} parent=1 // loop_pre_header
      _
    $region3: #{tpu_custom_call.1} parent=1 // loop_header
      %s22 = sphi 0, %s26
      %p23 = scmp.ge.s32.totalorder %s22, 4
      %s32 = sphi 0, %s34
      %s35 = sphi 0, %s32
      %s36 = sphi 0, %s35
      %s52 = sphi 0, %s36
      %s56 = sphi 0, %s56
      %s58 = sphi 0, %s56
      %s59 = sphi 0, %s58
      %s73 = sphi 0, %s59
      %s77 = sphi 0, %s77
      %s79 = sphi 0, %s77
      %s80 = sphi 0, %s79
      %s94 = sphi 0, %s80
      %s98 = sphi 0, %s98
      %s100 = sphi 0, %s98
      %s101 = sphi 0, %s100
      %s115 = sphi 0, %s101
      %s119 = sphi 0, %s119
      %s121 = sphi 0, %s119
      %s122 = sphi 0, %s121
      %s136 = sphi 0, %s122
      %s142 = sphi 0, %s144
      %s145 = sphi 0, %s142
      %s146 = sphi 0, %s145
      %s162 = sphi 0, %s146
      %s166 = sphi 0, %s166
      %s168 = sphi 0, %s166
      %s169 = sphi 0, %s168
      %s183 = sphi 0, %s169
      %s187 = sphi 0, %s187
      %s189 = sphi 0, %s187
      %s190 = sphi 0, %s189
      %s204 = sphi 0, %s190
    $region4: #{tpu_custom_call.1} parent=1 // loop_header_branch
      %25 = sbr.rel (%p23) target = $region8
    $region5: #{tpu_custom_call.1} parent=1 // loop_body
      %s27 = ssub.s32 %s22, 1
      %s28 = ssub.s32 %s22, 2
      %s29 = sadd.s32 %s22, 1
      %s30 = ssub.s32 %s22, %s29
      %p31 = scmp.eq.s32.totalorder %s30, 0
      %s33 = sadd.s32 %s32, 1
      %s34 = scalar_select %p31, %s32, %s33
      %p37 = pneg %p31
      %p38 = scmp.eq.s32.totalorder %s22, 1
      %p39 = por %p37, %p38
      %p40 = scmp.ne.s32.totalorder %s32, %s35
      %p41 = scmp.eq.s32.totalorder %s22, 0
      %p42 = por %p40, %p41
      %p43 = scmp.ne.s32.totalorder %s32, %s35
      %p44 = scmp.eq.s32.totalorder %s27, 1
      %p45 = por %p43, %p44
      %p46 = scmp.ne.s32.totalorder %s35, %s36
      %p47 = scmp.eq.s32.totalorder %s27, 0
      %p48 = por %p46, %p47
      %p49 = scmp.ne.s32.totalorder %s35, %s36
      %p50 = scmp.eq.s32.totalorder %s28, 1
      %p51 = por %p49, %p50
      %p53 = scmp.ne.s32.totalorder %s36, %s52
      %p54 = scmp.eq.s32.totalorder %s28, 0
      %p55 = por %p53, %p54
      %s57 = sadd.s32 %s56, 1
      %p60 = scmp.eq.s32.totalorder %s22, 1
      %p61 = scmp.ne.s32.totalorder %s56, %s58
      %p62 = scmp.eq.s32.totalorder %s22, 0
      %p63 = por %p61, %p62
      %p64 = scmp.ne.s32.totalorder %s56, %s58
      %p65 = scmp.eq.s32.totalorder %s27, 1
      %p66 = por %p64, %p65
      %p67 = scmp.ne.s32.totalorder %s58, %s59
      %p68 = scmp.eq.s32.totalorder %s27, 0
      %p69 = por %p67, %p68
      %p70 = scmp.ne.s32.totalorder %s58, %s59
      %p71 = scmp.eq.s32.totalorder %s28, 1
      %p72 = por %p70, %p71
      %p74 = scmp.ne.s32.totalorder %s59, %s73
      %p75 = scmp.eq.s32.totalorder %s28, 0
      %p76 = por %p74, %p75
      %s78 = sadd.s32 %s77, 1
      %p81 = scmp.eq.s32.totalorder %s22, 1
      %p82 = scmp.ne.s32.totalorder %s77, %s79
      %p83 = scmp.eq.s32.totalorder %s22, 0
      %p84 = por %p82, %p83
      %p85 = scmp.ne.s32.totalorder %s77, %s79
      %p86 = scmp.eq.s32.totalorder %s27, 1
      %p87 = por %p85, %p86
      %p88 = scmp.ne.s32.totalorder %s79, %s80
      %p89 = scmp.eq.s32.totalorder %s27, 0
      %p90 = por %p88, %p89
      %p91 = scmp.ne.s32.totalorder %s79, %s80
      %p92 = scmp.eq.s32.totalorder %s28, 1
      %p93 = por %p91, %p92
      %p95 = scmp.ne.s32.totalorder %s80, %s94
      %p96 = scmp.eq.s32.totalorder %s28, 0
      %p97 = por %p95, %p96
      %s99 = sadd.s32 %s98, 1
      %p102 = scmp.eq.s32.totalorder %s22, 1
      %p103 = scmp.ne.s32.totalorder %s98, %s100
      %p104 = scmp.eq.s32.totalorder %s22, 0
      %p105 = por %p103, %p104
      %p106 = scmp.ne.s32.totalorder %s98, %s100
      %p107 = scmp.eq.s32.totalorder %s27, 1
      %p108 = por %p106, %p107
      %p109 = scmp.ne.s32.totalorder %s100, %s101
      %p110 = scmp.eq.s32.totalorder %s27, 0
      %p111 = por %p109, %p110
      %p112 = scmp.ne.s32.totalorder %s100, %s101
      %p113 = scmp.eq.s32.totalorder %s28, 1
      %p114 = por %p112, %p113
      %p116 = scmp.ne.s32.totalorder %s101, %s115
      %p117 = scmp.eq.s32.totalorder %s28, 0
      %p118 = por %p116, %p117
      %s120 = sadd.s32 %s119, 1
      %p123 = scmp.eq.s32.totalorder %s22, 1
      %p124 = scmp.ne.s32.totalorder %s119, %s121
      %p125 = scmp.eq.s32.totalorder %s22, 0
      %p126 = por %p124, %p125
      %p127 = scmp.ne.s32.totalorder %s119, %s121
      %p128 = scmp.eq.s32.totalorder %s27, 1
      %p129 = por %p127, %p128
      %p130 = scmp.ne.s32.totalorder %s121, %s122
      %p131 = scmp.eq.s32.totalorder %s27, 0
      %p132 = por %p130, %p131
      %p133 = scmp.ne.s32.totalorder %s121, %s122
      %p134 = scmp.eq.s32.totalorder %s28, 1
      %p135 = por %p133, %p134
      %p137 = scmp.ne.s32.totalorder %s122, %s136
      %p138 = scmp.eq.s32.totalorder %s28, 0
      %p139 = por %p137, %p138
      %s140 = ssub.s32 %s22, %s29
      %p141 = scmp.eq.s32.totalorder %s140, 0
      %s143 = sadd.s32 %s142, 1
      %s144 = scalar_select %p141, %s142, %s143
      %p147 = pneg %p141
      %p148 = scmp.eq.s32.totalorder %s22, 1
      %p149 = por %p147, %p148
      %p150 = scmp.ne.s32.totalorder %s142, %s145
      %p151 = scmp.eq.s32.totalorder %s22, 0
      %p152 = por %p150, %p151
      %p153 = scmp.ne.s32.totalorder %s142, %s145
      %p154 = scmp.eq.s32.totalorder %s27, 1
      %p155 = por %p153, %p154
      %p156 = scmp.ne.s32.totalorder %s145, %s146
      %p157 = scmp.eq.s32.totalorder %s27, 0
      %p158 = por %p156, %p157
      %p159 = scmp.ne.s32.totalorder %s145, %s146
      %p160 = scmp.eq.s32.totalorder %s28, 1
      %p161 = por %p159, %p160
      %p163 = scmp.ne.s32.totalorder %s146, %s162
      %p164 = scmp.eq.s32.totalorder %s28, 0
      %p165 = por %p163, %p164
      %s167 = sadd.s32 %s166, 1
      %p170 = scmp.eq.s32.totalorder %s22, 1
      %p171 = scmp.ne.s32.totalorder %s166, %s168
      %p172 = scmp.eq.s32.totalorder %s22, 0
      %p173 = por %p171, %p172
      %p174 = scmp.ne.s32.totalorder %s166, %s168
      %p175 = scmp.eq.s32.totalorder %s27, 1
      %p176 = por %p174, %p175
      %p177 = scmp.ne.s32.totalorder %s168, %s169
      %p178 = scmp.eq.s32.totalorder %s27, 0
      %p179 = por %p177, %p178
      %p180 = scmp.ne.s32.totalorder %s168, %s169
      %p181 = scmp.eq.s32.totalorder %s28, 1
      %p182 = por %p180, %p181
      %p184 = scmp.ne.s32.totalorder %s169, %s183
      %p185 = scmp.eq.s32.totalorder %s28, 0
      %p186 = por %p184, %p185
      %s188 = sadd.s32 %s187, 1
      %p191 = scmp.eq.s32.totalorder %s22, 1
      %p192 = scmp.ne.s32.totalorder %s187, %s189
      %p193 = scmp.eq.s32.totalorder %s22, 0
      %p194 = por %p192, %p193
      %p195 = scmp.ne.s32.totalorder %s187, %s189
      %p196 = scmp.eq.s32.totalorder %s27, 1
      %p197 = por %p195, %p196
      %p198 = scmp.ne.s32.totalorder %s189, %s190
      %p199 = scmp.eq.s32.totalorder %s27, 0
      %p200 = por %p198, %p199
      %p201 = scmp.ne.s32.totalorder %s189, %s190
      %p202 = scmp.eq.s32.totalorder %s28, 1
      %p203 = por %p201, %p202
      %p205 = scmp.ne.s32.totalorder %s190, %s204
      %p206 = scmp.eq.s32.totalorder %s28, 0
      %p207 = por %p205, %p206
      %p208 = scmp.le.s32.totalorder 1, %s22
      %p209 = scmp.lt.s32.totalorder %s22, 3
      %p210 = pnand %p208, %p209
      %p211 = pneg %p210
      // Predicated region
      $region9: #{tpu_custom_call.1} parent=5 // pred_check
        _
      $region10: #{tpu_custom_call.1} parent=5 // pred_check_branch
        %213 = sbr.rel (%p210) target = $region12
      $region11: #{tpu_custom_call.1} parent=5 // pred_region
        %s214 = ssub.s32 %s22, 1
        // Predicated region
        $region13: #{tpu_custom_call.1} parent=11 // pred_check
          %p215 = pneg %p69
        $region14: #{tpu_custom_call.1} parent=11 // pred_check_branch
          %217 = sbr.rel (%p215) target = $region16
        $region15: #{tpu_custom_call.1} parent=11 // pred_region
          %s219 = ssub.s32 512, 512
          %220 = vsyncadd [#allocation6], %s219
          %s221 = sshll.u32 [#allocation5], 4
          %s222 = int_to_ptr.vmem [resolvable:$true] %s221
          %227 = dma.hbm_to_vmem [thread:$0]  %s1, 512, %s222, [#allocation6], 128, 128, 8
        $region16: #{tpu_custom_call.1} parent=11 // pred_fallthru
          _
        // Predicated region
        $region17: #{tpu_custom_call.1} parent=11 // pred_check
          %p228 = pneg %p90
        $region18: #{tpu_custom_call.1} parent=11 // pred_check_branch
          %230 = sbr.rel (%p228) target = $region20
        $region19: #{tpu_custom_call.1} parent=11 // pred_region
          _
        $region20: #{tpu_custom_call.1} parent=11 // pred_fallthru
          _
        // Predicated region
        $region21: #{tpu_custom_call.1} parent=11 // pred_check
          %p231 = pneg %p111
        $region22: #{tpu_custom_call.1} parent=11 // pred_check_branch
          %233 = sbr.rel (%p231) target = $region24
        $region23: #{tpu_custom_call.1} parent=11 // pred_region
          %s235 = ssub.s32 2048, 2048
          %236 = vsyncadd [#allocation6], %s235
          %s237 = sshll.u32 [#allocation7], 4
          %s238 = int_to_ptr.vmem [resolvable:$true] %s237
          %243 = dma.hbm_to_vmem [thread:$0]  %s3, 2048, %s238, [#allocation6], 64, 64, 4
        $region24: #{tpu_custom_call.1} parent=11 // pred_fallthru
          _
        // Predicated region
        $region25: #{tpu_custom_call.1} parent=11 // pred_check
          %p244 = pneg %p132
        $region26: #{tpu_custom_call.1} parent=11 // pred_check_branch
          %246 = sbr.rel (%p244) target = $region28
        $region27: #{tpu_custom_call.1} parent=11 // pred_region
          _
        $region28: #{tpu_custom_call.1} parent=11 // pred_fallthru
          _
      $region12: #{tpu_custom_call.1} parent=5 // pred_fallthru
        _
      %p247 = scmp.lt.s32.totalorder %s22, 2
      // Predicated region
      $region29: #{tpu_custom_call.1} parent=5 // pred_check
        %p248 = pneg %p247
      $region30: #{tpu_custom_call.1} parent=5 // pred_check_branch
        %250 = sbr.rel (%p248) target = $region32
      $region31: #{tpu_custom_call.1} parent=5 // pred_region
        // Predicated region
        $region33: #{tpu_custom_call.1} parent=31 // pred_check
          %p251 = pneg %p42
        $region34: #{tpu_custom_call.1} parent=31 // pred_check_branch
          %253 = sbr.rel (%p251) target = $region36
        $region35: #{tpu_custom_call.1} parent=31 // pred_region
          %s254 = sand.u32 %s32, 1
          %s255 = scalar_lea.sflag [#allocation3], %s254
          %s256 = sand.u32 %s32, 1
          %s257 = smul.addr %s256, 4
          %s258 = scalar_lea.vmem [#allocation2], %s257
          %s260 = ssub.s32 64, 64
          %261 = vsyncadd %s255, %s260
          %s262 = smul.addr %s22, 64
          %s263 = scalar_lea.hbm %s0, %s262
          %s265 = sshll.u32 %s258, 4
          %s266 = int_to_ptr.vmem [resolvable:$true] %s265
          %268 = dma.hbm_to_vmem [thread:$0]  %s263, 64, %s266, %s255
        $region36: #{tpu_custom_call.1} parent=31 // pred_fallthru
          _
      $region32: #{tpu_custom_call.1} parent=5 // pred_fallthru
        _
      %p269 = scmp.le.s32.totalorder 1, %s22
      %p270 = scmp.lt.s32.totalorder %s22, 3
      %p271 = pnand %p269, %p270
      %p272 = pneg %p271
      // Predicated region
      $region37: #{tpu_custom_call.1} parent=5 // pred_check
        _
      $region38: #{tpu_custom_call.1} parent=5 // pred_check_branch
        %274 = sbr.rel (%p271) target = $region40
      $region39: #{tpu_custom_call.1} parent=5 // pred_region
        %s275 = ssub.s32 %s22, 1
        %s276 = sand.u32 %s35, 1
        %s277 = scalar_lea.sflag [#allocation3], %s276
        %s278 = sand.u32 %s35, 1
        %s279 = smul.addr %s278, 4
        %s280 = scalar_lea.vmem [#allocation2], %s279
        // Predicated region
        $region41: #{tpu_custom_call.1} parent=39 // pred_check
          %p281 = pneg %p48
        $region42: #{tpu_custom_call.1} parent=39 // pred_check_branch
          %283 = sbr.rel (%p281) target = $region44
        $region43: #{tpu_custom_call.1} parent=39 // pred_region
          %284 = dma.done %s277, 64
        $region44: #{tpu_custom_call.1} parent=39 // pred_fallthru
          _
        // Predicated region
        $region45: #{tpu_custom_call.1} parent=39 // pred_check
          %p285 = pneg %p69
        $region46: #{tpu_custom_call.1} parent=39 // pred_check_branch
          %287 = sbr.rel (%p285) target = $region48
        $region47: #{tpu_custom_call.1} parent=39 // pred_region
          %288 = dma.done [#allocation6], 512
        $region48: #{tpu_custom_call.1} parent=39 // pred_fallthru
          _
        // Predicated region
        $region49: #{tpu_custom_call.1} parent=39 // pred_check
          %p289 = pneg %p111
        $region50: #{tpu_custom_call.1} parent=39 // pred_check_branch
          %291 = sbr.rel (%p289) target = $region52
        $region51: #{tpu_custom_call.1} parent=39 // pred_region
          %292 = dma.done [#allocation6], 2048
        $region52: #{tpu_custom_call.1} parent=39 // pred_fallthru
          _
        %s293 = sand.u32 %s35, 1
        %s294 = scalar_lea.sflag [#allocation3], %s293
        %s295 = sand.u32 %s35, 1
        %s296 = smul.addr %s295, 4
        %s297 = scalar_lea.vmem [#allocation2], %s296
        %p298 = pneg %p48
        %p299 = pneg %p45
        %p300 = pneg %p69
        %p301 = pneg %p66
        %p302 = pneg %p90
        %p303 = pneg %p87
        %p304 = pneg %p111
        %p305 = pneg %p108
        %p306 = pneg %p132
        %p307 = pneg %p129
        %p308 = pneg %p158
        %p309 = pneg %p155
        %s310 = sand.u32 %s145, 1
        %s311 = scalar_lea.sflag [#allocation4], %s310
        %s312 = sand.u32 %s145, 1
        %s313 = smul.addr %s312, 8
        %s314 = scalar_lea.vmem [#allocation8], %s313
        %p315 = pneg %p179
        %p316 = pneg %p176
        %p317 = pneg %p200
        %p318 = pneg %p197
        %v320 = vld [vmem:[%s280] sm:$0xf]
        %v321 = vld [vmem:[#allocation5] sm:$0xff]
        %v322 = vld [vmem:[#allocation5 + $0x8] sm:$0xff]
        %v323 = vld [vmem:[#allocation5 + $0x10] sm:$0xff]
        %v324 = vld [vmem:[#allocation5 + $0x18] sm:$0xff]
        %v325 = vld [vmem:[%s2] sm:$0x3]
        %v327 = vlaneseq
        %v328 = vshrl.u32 %v327, 7
        %v329 = vsub.s32 0, %v328
        %v330 = vrot.slane %v325, %v329
        %v331 = vlaneseq
        %v332 = vshrl.u32 %v331, 7
        %v333 = vsub.s32 1, %v332
        %v334 = vrot.slane %v325, %v333
        %v341 = vunpack.c.l.b16 %v321
        %v342 = vunpack.c.h.b16 %v321
        %v343 = vunpack.c.l.b16 %v322
        %v344 = vunpack.c.h.b16 %v322
        %v345 = vunpack.c.l.b16 %v323
        %v346 = vunpack.c.h.b16 %v323
        %v347 = vunpack.c.l.b16 %v324
        %v348 = vunpack.c.h.b16 %v324
        %v349 = vpack.c.b16 %v343, %v341
        %v350 = vpack.c.b16 %v344, %v342
        %v351 = vpack.c.b16 %v347, %v345
        %v352 = vpack.c.b16 %v348, %v346
        %vm357 = vcmask 261120
        %v359 = vsel %vm357, %v320, 0
        %361 = vmatprep.subr.bf16.mxu0 0
        %362 = vmatpush1.bf16.msra.mxu0 0
        %363 = vmatprep.subr.bf16.mxu0 0
        %364 = vmatpush1.bf16.msra.mxu0 0
        %365 = vmatprep.subr.bf16.mxu0 0
        %366 = vmatpush1.bf16.msra.mxu0 0
        %367 = vmatprep.subr.bf16.mxu0 0
        %368 = vmatpush1.bf16.msra.mxu0 0
        %369 = vmatprep.subr.bf16.mxu0 0
        %370 = vmatpush1.bf16.msra.mxu0 0
        %371 = vmatprep.subr.bf16.mxu0 0
        %372 = vmatpush1.bf16.msra.mxu0 0
        %373 = vmatprep.subr.bf16.mxu0 %v352
        %374 = vmatpush1.bf16.msra.mxu0 %v351
        %375 = vmatprep.subr.bf16.mxu0 %v350
        %376 = vmatpush1.bf16.msra.mxu0 %v349
        %377 = vmatprep.subr.bf16.mxu0 0
        %378 = vmatpush2.bf16.msra.mxu0 0
        %379 = vmatprep.subr.bf16.mxu0 0
        %380 = vmatpush2.bf16.msra.mxu0 0
        %381 = vmatprep.subr.bf16.mxu0 0
        %382 = vmatpush2.bf16.msra.mxu0 0
        %383 = vmatprep.subr.bf16.mxu0 0
        %384 = vmatpush2.bf16.msra.mxu0 0
        %385 = vmatprep.subr.bf16.mxu0 0
        %386 = vmatpush2.bf16.msra.mxu0 0
        %387 = vmatprep.subr.bf16.mxu0 0
        %388 = vmatpush2.bf16.msra.mxu0 0
        %389 = vmatprep.subr.bf16.mxu0 0
        %390 = vmatpush2.bf16.msra.mxu0 0
        %391 = vmatprep.subr.bf16.mxu0 0
        %392 = vmatpush2.bf16.msra.mxu0 0
        %393 = vmatprep.mubr.bf16.mxu0 0
        %394 = vmatmul.mubr.bf16.gmra.mxu0 %v359
        %v395 = vpop.f32.mrf.mxu0
        %v396 = vadd.f32 %v330, %v395
        %v397 = vpop.f32.mrf.mxu0
        %v398 = vadd.f32 %v334, %v397
        %v399 = vpop.f32.mrf.mxu0
        %v400 = vpop.f32.mrf.mxu0
        %401 = vdwg.mxu0
        %v402 = vmax.f32 %v396, 0.0
        %v403 = vmax.f32 %v398, 0.0
        %v404 = vpack.c.bf16 %v402, %v402
        %v405 = vpack.c.bf16 %v403, %v403
        %v406 = vld [vmem:[#allocation7] sm:$0xf]
        %v407 = vld [vmem:[#allocation7 + $0x4] sm:$0xf]
        %v408 = vld [vmem:[#allocation7 + $0x8] sm:$0xf]
        %v409 = vld [vmem:[#allocation7 + $0xc] sm:$0xf]
        %v410 = vld [vmem:[#allocation7 + $0x10] sm:$0xf]
        %v411 = vld [vmem:[#allocation7 + $0x14] sm:$0xf]
        %v412 = vld [vmem:[#allocation7 + $0x18] sm:$0xf]
        %v413 = vld [vmem:[#allocation7 + $0x1c] sm:$0xf]
        %v414 = vld [vmem:[#allocation7 + $0x20] sm:$0xf]
        %v415 = vld [vmem:[#allocation7 + $0x24] sm:$0xf]
        %v416 = vld [vmem:[#allocation7 + $0x28] sm:$0xf]
        %v417 = vld [vmem:[#allocation7 + $0x2c] sm:$0xf]
        %v418 = vld [vmem:[#allocation7 + $0x30] sm:$0xf]
        %v419 = vld [vmem:[#allocation7 + $0x34] sm:$0xf]
        %v420 = vld [vmem:[#allocation7 + $0x38] sm:$0xf]
        %v421 = vld [vmem:[#allocation7 + $0x3c] sm:$0xf]
        %v422 = vld [vmem:[#allocation7 + $0x40] sm:$0xf]
        %v423 = vld [vmem:[#allocation7 + $0x44] sm:$0xf]
        %v424 = vld [vmem:[#allocation7 + $0x48] sm:$0xf]
        %v425 = vld [vmem:[#allocation7 + $0x4c] sm:$0xf]
        %v426 = vld [vmem:[#allocation7 + $0x50] sm:$0xf]
        %v427 = vld [vmem:[#allocation7 + $0x54] sm:$0xf]
        %v428 = vld [vmem:[#allocation7 + $0x58] sm:$0xf]
        %v429 = vld [vmem:[#allocation7 + $0x5c] sm:$0xf]
        %v430 = vld [vmem:[#allocation7 + $0x60] sm:$0xf]
        %v431 = vld [vmem:[#allocation7 + $0x64] sm:$0xf]
        %v432 = vld [vmem:[#allocation7 + $0x68] sm:$0xf]
        %v433 = vld [vmem:[#allocation7 + $0x6c] sm:$0xf]
        %v434 = vld [vmem:[#allocation7 + $0x70] sm:$0xf]
        %v435 = vld [vmem:[#allocation7 + $0x74] sm:$0xf]
        %v436 = vld [vmem:[#allocation7 + $0x78] sm:$0xf]
        %v437 = vld [vmem:[#allocation7 + $0x7c] sm:$0xf]
        %v438 = vld [vmem:[%s4] sm:$0x1]
        %v440 = vlaneseq
        %v441 = vshrl.u32 %v440, 7
        %v442 = vsub.s32 0, %v441
        %v443 = vrot.slane %v438, %v442
        %v477 = vunpack.c.l.b16 %v406
        %v478 = vunpack.c.l.b16 %v407
        %v479 = vunpack.c.l.b16 %v408
        %v480 = vunpack.c.l.b16 %v409
        %v481 = vunpack.c.l.b16 %v410
        %v482 = vunpack.c.l.b16 %v411
        %v483 = vunpack.c.l.b16 %v412
        %v484 = vunpack.c.l.b16 %v413
        %v485 = vunpack.c.l.b16 %v414
        %v486 = vunpack.c.l.b16 %v415
        %v487 = vunpack.c.l.b16 %v416
        %v488 = vunpack.c.l.b16 %v417
        %v489 = vunpack.c.l.b16 %v418
        %v490 = vunpack.c.l.b16 %v419
        %v491 = vunpack.c.l.b16 %v420
        %v492 = vunpack.c.l.b16 %v421
        %v493 = vunpack.c.l.b16 %v422
        %v494 = vunpack.c.l.b16 %v423
        %v495 = vunpack.c.l.b16 %v424
        %v496 = vunpack.c.l.b16 %v425
        %v497 = vunpack.c.l.b16 %v426
        %v498 = vunpack.c.l.b16 %v427
        %v499 = vunpack.c.l.b16 %v428
        %v500 = vunpack.c.l.b16 %v429
        %v501 = vunpack.c.l.b16 %v430
        %v502 = vunpack.c.l.b16 %v431
        %v503 = vunpack.c.l.b16 %v432
        %v504 = vunpack.c.l.b16 %v433
        %v505 = vunpack.c.l.b16 %v434
        %v506 = vunpack.c.l.b16 %v435
        %v507 = vunpack.c.l.b16 %v436
        %v508 = vunpack.c.l.b16 %v437
        %v509 = vpack.c.b16 %v478, %v477
        %v510 = vpack.c.b16 %v480, %v479
        %v511 = vpack.c.b16 %v482, %v481
        %v512 = vpack.c.b16 %v484, %v483
        %v513 = vpack.c.b16 %v486, %v485
        %v514 = vpack.c.b16 %v488, %v487
        %v515 = vpack.c.b16 %v490, %v489
        %v516 = vpack.c.b16 %v492, %v491
        %v517 = vpack.c.b16 %v494, %v493
        %v518 = vpack.c.b16 %v496, %v495
        %v519 = vpack.c.b16 %v498, %v497
        %v520 = vpack.c.b16 %v500, %v499
        %v521 = vpack.c.b16 %v502, %v501
        %v522 = vpack.c.b16 %v504, %v503
        %v523 = vpack.c.b16 %v506, %v505
        %v524 = vpack.c.b16 %v508, %v507
        %541 = vmatprep.subr.bf16.mxu0 0
        %542 = vmatpush1.bf16.msra.mxu0 %v516
        %543 = vmatprep.subr.bf16.mxu0 0
        %544 = vmatpush1.bf16.msra.mxu0 %v515
        %545 = vmatprep.subr.bf16.mxu0 0
        %546 = vmatpush1.bf16.msra.mxu0 %v514
        %547 = vmatprep.subr.bf16.mxu0 0
        %548 = vmatpush1.bf16.msra.mxu0 %v513
        %549 = vmatprep.subr.bf16.mxu0 0
        %550 = vmatpush1.bf16.msra.mxu0 %v512
        %551 = vmatprep.subr.bf16.mxu0 0
        %552 = vmatpush1.bf16.msra.mxu0 %v511
        %553 = vmatprep.subr.bf16.mxu0 0
        %554 = vmatpush1.bf16.msra.mxu0 %v510
        %555 = vmatprep.subr.bf16.mxu0 0
        %556 = vmatpush1.bf16.msra.mxu0 %v509
        %557 = vmatprep.subr.bf16.mxu0 0
        %558 = vmatpush2.bf16.msra.mxu0 %v524
        %559 = vmatprep.subr.bf16.mxu0 0
        %560 = vmatpush2.bf16.msra.mxu0 %v523
        %561 = vmatprep.subr.bf16.mxu0 0
        %562 = vmatpush2.bf16.msra.mxu0 %v522
        %563 = vmatprep.subr.bf16.mxu0 0
        %564 = vmatpush2.bf16.msra.mxu0 %v521
        %565 = vmatprep.subr.bf16.mxu0 0
        %566 = vmatpush2.bf16.msra.mxu0 %v520
        %567 = vmatprep.subr.bf16.mxu0 0
        %568 = vmatpush2.bf16.msra.mxu0 %v519
        %569 = vmatprep.subr.bf16.mxu0 0
        %570 = vmatpush2.bf16.msra.mxu0 %v518
        %571 = vmatprep.subr.bf16.mxu0 0
        %572 = vmatpush2.bf16.msra.mxu0 %v517
        %573 = vmatprep.mubr.bf16.mxu0 %v405
        %574 = vmatmul.mubr.bf16.gmra.mxu0 %v404
        %v575 = vpop.f32.mrf.mxu0
        %v576 = vadd.f32 %v443, %v575
        %v577 = vpop.f32.mrf.mxu0
        %v578 = vpop.f32.mrf.mxu0
        %v579 = vpop.f32.mrf.mxu0
        %580 = vdwg.mxu0
        %581 = vst [vmem:[%s314] sm:$0xff] %v576
        %p582 = scmp.eq.s32.totalorder %s27, 0
        // Predicated region
        $region53: #{tpu_custom_call.1} parent=39 // pred_check
          %p583 = pneg %p582
        $region54: #{tpu_custom_call.1} parent=39 // pred_check_branch
          %585 = sbr.rel (%p583) target = $region56
        $region55: #{tpu_custom_call.1} parent=39 // pred_region
          %586 = vst [vmem:[#allocation9] sm:$0x1] 0.0
          %587 = vst [vmem:[#allocation11] sm:$0x1] 0.0
        $region56: #{tpu_custom_call.1} parent=39 // pred_fallthru
          _
        %v588 = vld [vmem:[#allocation9] sm:$0x1]
        %v589 = vrot.slane %v576, 4
        %v590 = vadd.f32 %v576, %v589
        %v591 = vrot.slane %v590, 2
        %v592 = vadd.f32 %v590, %v591
        %v593 = vrot.slane %v592, 1
        %v594 = vadd.f32 %v592, %v593
        %v595 = vadd.f32 %v588, %v594
        %596 = vst [vmem:[#allocation9] sm:$0x1] %v595
        %v597 = vld [vmem:[#allocation11] sm:$0x1]
        %v598 = vmul.f32 %v576, %v576
        %v599 = vrot.slane %v598, 4
        %v600 = vadd.f32 %v598, %v599
        %v601 = vrot.slane %v600, 2
        %v602 = vadd.f32 %v600, %v601
        %v603 = vrot.slane %v602, 1
        %v604 = vadd.f32 %v602, %v603
        %v605 = vadd.f32 %v597, %v604
        %606 = vst [vmem:[#allocation11] sm:$0x1] %v605
        %s607 = sand.u32 %s145, 1
        %s608 = scalar_lea.sflag [#allocation4], %s607
        %s609 = sand.u32 %s145, 1
        %s610 = smul.addr %s609, 8
        %s611 = scalar_lea.vmem [#allocation8], %s610
        // Predicated region
        $region57: #{tpu_custom_call.1} parent=39 // pred_check
          %p612 = pneg %p155
        $region58: #{tpu_custom_call.1} parent=39 // pred_check_branch
          %614 = sbr.rel (%p612) target = $region60
        $region59: #{tpu_custom_call.1} parent=39 // pred_region
          %s616 = ssub.s32 128, 128
          %617 = vsyncadd %s608, %s616
          %s618 = smul.addr %s27, 128
          %s619 = scalar_lea.hbm %s5, %s618
          %s621 = sshll.u32 %s611, 4
          %s622 = int_to_ptr.vmem [resolvable:$true] %s621
          %624 = dma.vmem_to_hbm [thread:$0]  %s622, 128, %s619, %s608
        $region60: #{tpu_custom_call.1} parent=39 // pred_fallthru
          _
        // Predicated region
        $region61: #{tpu_custom_call.1} parent=39 // pred_check
          %p625 = pneg %p176
        $region62: #{tpu_custom_call.1} parent=39 // pred_check_branch
          %627 = sbr.rel (%p625) target = $region64
        $region63: #{tpu_custom_call.1} parent=39 // pred_region
          %s629 = ssub.s32 16, 16
          %630 = vsyncadd [#allocation10], %s629
          %s632 = sshll.u32 [#allocation9], 4
          %s633 = int_to_ptr.vmem [resolvable:$true] %s632
          %635 = dma.vmem_to_hbm [thread:$0]  %s633, 16, %s6, [#allocation10]
        $region64: #{tpu_custom_call.1} parent=39 // pred_fallthru
          _
        // Predicated region
        $region65: #{tpu_custom_call.1} parent=39 // pred_check
          %p636 = pneg %p197
        $region66: #{tpu_custom_call.1} parent=39 // pred_check_branch
          %638 = sbr.rel (%p636) target = $region68
        $region67: #{tpu_custom_call.1} parent=39 // pred_region
          %s640 = ssub.s32 16, 16
          %641 = vsyncadd [#allocation10], %s640
          %s643 = sshll.u32 [#allocation11], 4
          %s644 = int_to_ptr.vmem [resolvable:$true] %s643
          %646 = dma.vmem_to_hbm [thread:$0]  %s644, 16, %s7, [#allocation10]
        $region68: #{tpu_custom_call.1} parent=39 // pred_fallthru
          _
        // Predicated region
        $region69: #{tpu_custom_call.1} parent=39 // pred_check
          %p647 = pneg %p176
        $region70: #{tpu_custom_call.1} parent=39 // pred_check_branch
          %649 = sbr.rel (%p647) target = $region72
        $region71: #{tpu_custom_call.1} parent=39 // pred_region
          %650 = dma.done [#allocation10], 16
        $region72: #{tpu_custom_call.1} parent=39 // pred_fallthru
          _
        // Predicated region
        $region73: #{tpu_custom_call.1} parent=39 // pred_check
          %p651 = pneg %p197
        $region74: #{tpu_custom_call.1} parent=39 // pred_check_branch
          %653 = sbr.rel (%p651) target = $region76
        $region75: #{tpu_custom_call.1} parent=39 // pred_region
          %654 = dma.done [#allocation10], 16
        $region76: #{tpu_custom_call.1} parent=39 // pred_fallthru
          _
      $region40: #{tpu_custom_call.1} parent=5 // pred_fallthru
        _
      %p655 = scmp.le.s32.totalorder 2, %s22
      // Predicated region
      $region77: #{tpu_custom_call.1} parent=5 // pred_check
        %p656 = pneg %p655
      $region78: #{tpu_custom_call.1} parent=5 // pred_check_branch
        %658 = sbr.rel (%p656) target = $region80
      $region79: #{tpu_custom_call.1} parent=5 // pred_region
        %s659 = ssub.s32 %s22, 2
        // Predicated region
        $region81: #{tpu_custom_call.1} parent=79 // pred_check
          %p660 = pneg %p161
        $region82: #{tpu_custom_call.1} parent=79 // pred_check_branch
          %662 = sbr.rel (%p660) target = $region84
        $region83: #{tpu_custom_call.1} parent=79 // pred_region
          %s663 = sand.u32 %s146, 1
          %s664 = scalar_lea.sflag [#allocation4], %s663
          %s665 = sand.u32 %s146, 1
          %s666 = smul.addr %s665, 8
          %s667 = scalar_lea.vmem [#allocation8], %s666
          %668 = dma.done %s664, 128
        $region84: #{tpu_custom_call.1} parent=79 // pred_fallthru
          _
      $region80: #{tpu_custom_call.1} parent=5 // pred_fallthru
        _
    $region6: #{tpu_custom_call.1} parent=1 // loop_footer
      %s26 = sadd.s32 1, %s22
    $region7: #{tpu_custom_call.1} parent=1 // loop_footer_branch
      %21 = sbr.rel target = $region3
    $region8: #{tpu_custom_call.1} parent=1 // loop_exit
      _
    %669 = vsyncpa [#allocation3], 1
    %s670 = scalar_lea.sflag [#allocation3], 1
    %671 = vsyncpa %s670, 1
    %672 = vsyncpa [#allocation6], 1
    %673 = vsyncpa [#allocation4], 1
    %s674 = scalar_lea.sflag [#allocation4], 1
    %675 = vsyncpa %s674, 1
    %676 = vsyncpa [#allocation10], 1

</llo_original>
